<compile_context>
chip_gen: v6e
topology: v6e:2x2x1
jax: 0.10.0
libtpu: 0.0.40
codegen_flags: <defaults>
</compile_context>

<pallas_src>
import math
import functools

import jax
import jax.numpy as jnp
from jax import lax
from jax.experimental import pallas as pl
from jax.experimental.pallas import tpu as pltpu


# ---------------------------------------------------------------------------
# Helpers
# ---------------------------------------------------------------------------
def _pick_tile(dim, target, align):
    """Largest tile <= target that is a multiple of `align` and divides `dim`.
    Falls back to the full dimension (always a legal TPU block)."""
    if dim <= target:
        return dim
    t = (target // align) * align
    while t >= align:
        if dim % t == 0:
            return t
        t -= align
    return dim


def _vmem_capacity_bytes():
    """Physical VMEM per core; conservative 64 MiB (v7x) fallback."""
    try:
        cap = getattr(pltpu.get_tpu_info(), "vmem_capacity_bytes", None)
        if cap:
            return int(cap)
    except Exception:
        pass
    return 64 * 1024 * 1024


# ---------------------------------------------------------------------------
# Kernel 1: tiled dense layer  y = x @ w_t + b
#   w_t is the torch weight pre-transposed to (in, out) layout and pre-cast to
#   bf16 on the host -> standard (tm,tk)@(tk,tn) MXU feed, f32 accumulation.
# ---------------------------------------------------------------------------
def _linear_kernel(x_ref, w_ref, b_ref, o_ref, acc_ref):
    k = pl.program_id(2)

    @pl.when(k == 0)
    def _():
        acc_ref[...] = jnp.zeros_like(acc_ref)

    acc_ref[...] += jnp.dot(x_ref[...], w_ref[...],
                            preferred_element_type=jnp.float32)

    @pl.when(k == pl.num_programs(2) - 1)
    def _():
        o_ref[...] = (acc_ref[...] + b_ref[...]).astype(o_ref.dtype)


def linear(x, w_t, b, *, out_dtype=jnp.float32):
    """x: (T, K) bf16, w_t: (K, N) bf16 (pre-transposed), b: (N,) f32."""
    T, K = x.shape
    N = w_t.shape[1]
    big_vmem = _vmem_capacity_bytes() > 96 * 1024 * 1024   # v5e/v6e vs v7x
    tgt = 512 if big_vmem else 256
    tm = _pick_tile(T, tgt, 8)
    tn = _pick_tile(N, tgt, 128)
    tk = _pick_tile(K, 512, 128)
    grid = (T // tm, N // tn, K // tk)
    b2 = b.reshape(1, N).astype(jnp.float32)

    cost = pl.CostEstimate(
        flops=2 * T * K * N,
        transcendentals=0,
        bytes_accessed=int(x.dtype.itemsize * T * K + 2 * K * N + 4 * N
                           + jnp.dtype(out_dtype).itemsize * T * N),
    )
    return pl.pallas_call(
        _linear_kernel,
        grid=grid,
        in_specs=[
            pl.BlockSpec((tm, tk), lambda i, j, k: (i, k)),
            pl.BlockSpec((tk, tn), lambda i, j, k: (k, j)),
            pl.BlockSpec((1, tn), lambda i, j, k: (0, j)),
        ],
        out_specs=pl.BlockSpec((tm, tn), lambda i, j, k: (i, j)),
        out_shape=jax.ShapeDtypeStruct((T, N), out_dtype),
        scratch_shapes=[pltpu.VMEM((tm, tn), jnp.float32)],
        compiler_params=pltpu.CompilerParams(
            dimension_semantics=("parallel", "parallel", "arbitrary"),
            vmem_limit_bytes=(64 if big_vmem else 32) * 1024 * 1024,
        ),
        cost_estimate=cost,
    )(x, w_t, b2)


# ---------------------------------------------------------------------------
# Kernel 2: scaled-dot-product attention + head merge + FUSED out-projection.
# One grid step = one batch element, one L-tile, all heads.
#   q/k/v refs: (1, tl, E) / (1, S, E) bf16 blocks, selected directly from the
#   batch-major (and optionally packed 3E-wide) projection output.
#   Outputs: final attn_output (N, L, E) f32 and averaged weights (N, L, S).
# ---------------------------------------------------------------------------
def _sdpa_outproj_kernel(q_ref, k_ref, v_ref, wo_ref, bo_ref, o_ref, w_ref,
                         kt_ref, *, scale, num_heads, head_dim):
    H, Dh = num_heads, head_dim

    # Transpose K ONCE per batch (l == 0) into a VMEM scratch so every q.k^T
    # matmul is a standard (tl, Dh) @ (Dh, S) with S lane-dense.  The l grid
    # axis is "arbitrary", so this priming step is guaranteed to run first.
    @pl.when(pl.program_id(1) == 0)
    def _():
        kt_ref[...] = k_ref[0].T                              # (E, S) bf16

    q = q_ref[0]                                              # (tl, E) bf16
    v = v_ref[0]                                              # (S,  E) bf16

    outs = []
    w_sum = None
    for h in range(H):                                        # static unroll
        qh = q[:, h * Dh:(h + 1) * Dh]                        # (tl, Dh)
        kth = kt_ref[h * Dh:(h + 1) * Dh, :]                  # (Dh, S)
        s = jnp.dot(qh, kth, preferred_element_type=jnp.float32) * scale
        m = jnp.max(s, axis=-1, keepdims=True)
        e = jnp.exp(s - m)
        p = e * pl.reciprocal(jnp.sum(e, axis=-1, keepdims=True), approx=False)
        w_sum = p if w_sum is None else w_sum + p
        vh = v[:, h * Dh:(h + 1) * Dh]                        # (S, Dh)
        outs.append(jnp.dot(p.astype(jnp.bfloat16), vh,
                            preferred_element_type=jnp.float32))  # (tl, Dh)

    # Merge heads lane-dense (E on lanes) and fuse the output projection.
    o = jnp.concatenate(outs, axis=-1).astype(jnp.bfloat16)       # (tl, E)
    y = jnp.dot(o, wo_ref[...], preferred_element_type=jnp.float32) + bo_ref[...]
    o_ref[0] = y.astype(o_ref.dtype)
    w_ref[0] = (w_sum * (1.0 / num_heads)).astype(w_ref.dtype)


def sdpa_outproj(q_arr, k_arr, v_arr, w_out_t, b_out, *, num_heads, packed,
                 seq_q, seq_k):
    """q_arr: (N, L, E) or packed (N, L, 3E) bf16; k_arr/v_arr likewise.
    Returns (out (N, L, E) f32, attn_w_avg (N, L, S) f32)."""
    N = q_arr.shape[0]
    L, S = seq_q, seq_k
    E = w_out_t.shape[0]
    H = num_heads
    Dh = E // H

    big_vmem = _vmem_capacity_bytes() > 96 * 1024 * 1024
    vmem_limit = (64 if big_vmem else 32) * 1024 * 1024

    # Shrink the L tile until resident K/V + score temporaries fit VMEM.
    def est(t):
        return (2 * 2 * S * E * 2            # K, V blocks (bf16, double-buffered)
                + 2 * t * E * 2              # q tile
                + 2 * t * E * 4              # output block (f32)
                + 2 * t * S * 4              # averaged-weights block (f32)
                + E * S * 2                  # kT scratch
                + 4 * t * S * 4              # f32 score/exp temporaries
                + 2 * (E * E * 2 + E * 4))   # w_out^T + bias
    tl = _pick_tile(L, 256, 8)
    while tl > 8 and est(tl) > 0.7 * vmem_limit:
        nt = _pick_tile(L, tl // 2, 8)
        if nt >= tl:
            break
        tl = nt

    grid = (N, L // tl)
    kcol, vcol = (1, 2) if packed else (0, 0)   # block index into packed 3E dim

    kernel = functools.partial(_sdpa_outproj_kernel,
                               scale=1.0 / math.sqrt(Dh),
                               num_heads=H, head_dim=Dh)
    cost = pl.CostEstimate(
        flops=int(4 * N * H * L * S * Dh + 2 * N * L * E * E),
        transcendentals=int(N * H * L * S),
        bytes_accessed=int(2 * N * L * E + 2 * 2 * N * S * E + 2 * E * E
                           + 4 * E + 4 * N * L * E + 4 * N * L * S),
    )
    return pl.pallas_call(
        kernel,
        grid=grid,
        in_specs=[
            pl.BlockSpec((1, tl, E), lambda n, l: (n, l, 0)),
            pl.BlockSpec((1, S, E), lambda n, l: (n, 0, kcol)),
            pl.BlockSpec((1, S, E), lambda n, l: (n, 0, vcol)),
            pl.BlockSpec((E, E), lambda n, l: (0, 0)),
            pl.BlockSpec((1, E), lambda n, l: (0, 0)),
        ],
        out_specs=[
            pl.BlockSpec((1, tl, E), lambda n, l: (n, l, 0)),
            pl.BlockSpec((1, tl, S), lambda n, l: (n, l, 0)),
        ],
        out_shape=[
            jax.ShapeDtypeStruct((N, L, E), jnp.float32),
            jax.ShapeDtypeStruct((N, L, S), jnp.float32),
        ],
        scratch_shapes=[pltpu.VMEM((E, S), jnp.bfloat16)],
        compiler_params=pltpu.CompilerParams(
            # n is parallel (megacore / v7x 2-TC split); l is "arbitrary"
            # because the kT scratch is primed at l == 0 and K/V stay resident
            # across the l axis.
            dimension_semantics=("parallel", "arbitrary"),
            vmem_limit_bytes=vmem_limit,
        ),
        cost_estimate=cost,
    )(q_arr, k_arr, v_arr, w_out_t, b_out)


# ---------------------------------------------------------------------------
# Multihead attention forward (dropout=0, no masks, need_weights=True,
# batch_first=False, bias=True) — matches the PyTorch module.
# ---------------------------------------------------------------------------
def multihead_attention(query, key, value, params, num_heads):
    L, N, E = query.shape
    S = key.shape[0]
    H = num_heads

    w_in = params["in_proj_weight"]      # (3E, E) torch layout
    b_in = params["in_proj_bias"]        # (3E,)
    w_out = params["out_proj_weight"]    # (E, E)
    b_out = params["out_proj_bias"]      # (E,)

    # One-time host-side weight prep: (in, out) layout + bf16.
    w_in_t = w_in.T.astype(jnp.bfloat16)       # (E, 3E)
    w_out_t = w_out.T.astype(jnp.bfloat16)     # (E, E)
    b_out2 = b_out.reshape(1, E).astype(jnp.float32)

    self_attn = (query is key) and (key is value)

    if self_attn:
        # One input transpose to batch-major, one packed GEMM (N*L,E)@(E,3E);
        # the result stays packed in HBM (no jnp.split): the SDPA BlockSpecs
        # select q/k/v via the last-dim block index.
        x = jnp.transpose(query, (1, 0, 2)).astype(jnp.bfloat16)   # (N, L, E)
        qkv = linear(x.reshape(N * L, E), w_in_t, b_in,
                     out_dtype=jnp.bfloat16).reshape(N, L, 3 * E)
        packed = (E % 128 == 0)          # lane-aligned packed slicing
        if packed:
            q_arr = k_arr = v_arr = qkv
        else:
            # TODO(synk): unaligned E falls back to three host-side slices.
            q_arr = qkv[:, :, :E]
            k_arr = qkv[:, :, E:2 * E]
            v_arr = qkv[:, :, 2 * E:]
    else:
        packed = False
        xq = jnp.transpose(query, (1, 0, 2)).astype(jnp.bfloat16)
        xk = jnp.transpose(key, (1, 0, 2)).astype(jnp.bfloat16)
        xv = jnp.transpose(value, (1, 0, 2)).astype(jnp.bfloat16)
        q_arr = linear(xq.reshape(N * L, E), w_in_t[:, :E], b_in[:E],
                       out_dtype=jnp.bfloat16).reshape(N, L, E)
        k_arr = linear(xk.reshape(N * S, E), w_in_t[:, E:2 * E], b_in[E:2 * E],
                       out_dtype=jnp.bfloat16).reshape(N, S, E)
        v_arr = linear(xv.reshape(N * S, E), w_in_t[:, 2 * E:], b_in[2 * E:],
                       out_dtype=jnp.bfloat16).reshape(N, S, E)

    out_nle, attn_w = sdpa_outproj(q_arr, k_arr, v_arr, w_out_t, b_out2,
                                   num_heads=H, packed=packed,
                                   seq_q=L, seq_k=S)
    # Single output transpose back to the module's (L, N, E) layout.
    return jnp.transpose(out_nle, (1, 0, 2)), attn_w


# ---------------------------------------------------------------------------
# Deterministic parameter init (xavier_uniform weights, zero biases)
# ---------------------------------------------------------------------------
def xavier_uniform(key, shape):
    fan_out, fan_in = shape
    a = math.sqrt(6.0 / (fan_in + fan_out))
    return jax.random.uniform(key, shape, jnp.float32, minval=-a, maxval=a)


def init_params(key, embed_dim):
    k1, k2 = jax.random.split(key)
    return {
        "in_proj_weight": xavier_uniform(k1, (3 * embed_dim, embed_dim)),
        "in_proj_bias": jnp.zeros((3 * embed_dim,), jnp.float32),
        "out_proj_weight": xavier_uniform(k2, (embed_dim, embed_dim)),
        "out_proj_bias": jnp.zeros((embed_dim,), jnp.float32),
    }


# ---------------------------------------------------------------------------
# Pure-JAX reference.  compute_dtype=bfloat16 mirrors the kernels' bf16
# matmul inputs (tight check); compute_dtype=float32 is the exact module
# semantics (loose check, bf16-MXU precision).
# ---------------------------------------------------------------------------
def reference(query, key, value, params, num_heads, compute_dtype=jnp.float32):
    L, N, E = query.shape
    S = key.shape[0]
    H = num_heads
    Dh = E // H
    cd = compute_dtype
    w_in, b_in = params["in_proj_weight"], params["in_proj_bias"]
    w_out, b_out = params["out_proj_weight"], params["out_proj_bias"]

    def lin(x, w, b):
        y = lax.dot_general(x.astype(cd), w.astype(cd),
                            (((x.ndim - 1,), (1,)), ((), ())),
                            preferred_element_type=jnp.float32)
        return y + b

    q_p = lin(query, w_in[:E], b_in[:E])
    k_p = lin(key, w_in[E:2 * E], b_in[E:2 * E])
    v_p = lin(value, w_in[2 * E:], b_in[2 * E:])

    q_h = q_p.reshape(L, N, H, Dh).transpose(1, 2, 0, 3)
    k_h = k_p.reshape(S, N, H, Dh).transpose(1, 2, 0, 3)
    v_h = v_p.reshape(S, N, H, Dh).transpose(1, 2, 0, 3)

    s = jnp.einsum("nhld,nhsd->nhls", q_h.astype(cd), k_h.astype(cd),
                   preferred_element_type=jnp.float32) * (1.0 / math.sqrt(Dh))
    p = jax.nn.softmax(s, axis=-1)
    o = jnp.einsum("nhls,nhsd->nhld", p.astype(cd), v_h.astype(cd),
                   preferred_element_type=jnp.float32)
    o = o.transpose(2, 0, 1, 3).reshape(L, N, E)
    out = lin(o, w_out, b_out)
    return out, jnp.mean(p, axis=1)


if __name__ == "__main__":
    # Small shapes: seq L=S=8, batch N=2, embed E=128, heads=4 (head_dim=32).
    # E=128 keeps the packed q/k/v slicing lane-aligned (E % 128 == 0 path).
    L, N, E, H = 8, 2, 128, 4
    key = jax.random.PRNGKey(0)
    k_x, k_p = jax.random.split(key)

    x = jax.random.normal(k_x, (L, N, E), jnp.float32)   # self-attention: q=k=v
    params = init_params(k_p, E)

    out, attn_w = multihead_attention(x, x, x, params, H)
    out = jax.block_until_ready(out)
    attn_w = jax.block_until_ready(attn_w)

    assert out.shape == (L, N, E)
    assert attn_w.shape == (N, L, L)

    # Tight check vs. bf16-matmul reference (same numerics as the kernels).
    ref_out_bf, ref_w_bf = reference(x, x, x, params, H, compute_dtype=jnp.bfloat16)
    assert jnp.allclose(out, ref_out_bf, atol=2e-3, rtol=2e-3)
    assert jnp.allclose(attn_w, ref_w_bf, atol=2e-3, rtol=2e-3)

    # Loose check vs. exact f32 module semantics (bf16 MXU precision).
    ref_out_f32, ref_w_f32 = reference(x, x, x, params, H, compute_dtype=jnp.float32)
    assert jnp.allclose(out, ref_out_f32, atol=1e-1, rtol=1e-1)
    assert jnp.allclose(attn_w, ref_w_f32, atol=1e-1, rtol=1e-1)

    print("KERNEL_OK")
</pallas_src>

<mosaic_0001>
module attributes {stable_mosaic.version = 11 : i64} {
  func.func @_linear_kernel(%arg0: i32, %arg1: i32, %arg2: i32, %arg3: memref<16x128xbf16, #tpu.memory_space<vmem>>, %arg4: memref<128x128xbf16, #tpu.memory_space<vmem>>, %arg5: memref<1x128xf32, #tpu.memory_space<vmem>>, %arg6: memref<16x128xbf16, #tpu.memory_space<vmem>>, %arg7: memref<16x128xf32, #tpu.memory_space<vmem>>) attributes {dimension_semantics = [#tpu.dimension_semantics<parallel>, #tpu.dimension_semantics<parallel>, #tpu.dimension_semantics<arbitrary>], iteration_bounds = array<i64: 1, 3, 1>, scalar_prefetch = 0 : i64, scratch_operands = 1 : i64, tpu.core_type = #tpu.core_type<tc>, window_params = [{transform_indices = @transform_0, window_bounds = array<i64: 16, 128>}, {transform_indices = @transform_1, window_bounds = array<i64: 128, 128>}, {transform_indices = @transform_2, window_bounds = array<i64: 1, 128>}, {transform_indices = @transform_3, window_bounds = array<i64: 16, 128>}]} {
    %c0_i32 = arith.constant 0 : i32
    %0 = arith.cmpi eq, %arg2, %c0_i32 : i32
    %1 = arith.extui %0 : i1 to i32
    %c0_i32_0 = arith.constant 0 : i32
    %2 = arith.cmpi ne, %1, %c0_i32_0 : i32
    scf.if %2 {
      %cst_10 = arith.constant 0.000000e+00 : f32
      %12 = vector.broadcast %cst_10 : f32 to vector<16x128xf32>
      %c0_11 = arith.constant 0 : index
      %c0_12 = arith.constant 0 : index
      %13 = vector.load %arg7[%c0_11, %c0_12] : memref<16x128xf32, #tpu.memory_space<vmem>>, vector<16x128xf32>
      tpu.vector_store %arg7[%c0_11, %c0_12], %12 {strides = array<i32>} : memref<16x128xf32, #tpu.memory_space<vmem>>, vector<16x128xf32>,
    } else {
    }
    %c0 = arith.constant 0 : index
    %c0_1 = arith.constant 0 : index
    %3 = vector.load %arg7[%c0, %c0_1] : memref<16x128xf32, #tpu.memory_space<vmem>>, vector<16x128xf32>
    %c0_2 = arith.constant 0 : index
    %c0_3 = arith.constant 0 : index
    %4 = vector.load %arg3[%c0_2, %c0_3] : memref<16x128xbf16, #tpu.memory_space<vmem>>, vector<16x128xbf16>
    %c0_4 = arith.constant 0 : index
    %c0_5 = arith.constant 0 : index
    %5 = vector.load %arg4[%c0_4, %c0_5] : memref<128x128xbf16, #tpu.memory_space<vmem>>, vector<128x128xbf16>
    %cst = arith.constant dense<0.000000e+00> : vector<16x128xf32>
    %6 = tpu.matmul %4, %5, %cst {dimension_numbers = #tpu.dot_dimension_numbers<[1], [0], [0], [1], [0, 0, 1, 1], [], []>} : vector<16x128xbf16>, vector<128x128xbf16>, vector<16x128xf32> -> vector<16x128xf32>
    %7 = arith.addf %3, %6 : vector<16x128xf32>
    %c0_6 = arith.constant 0 : index
    %c0_7 = arith.constant 0 : index
    %8 = vector.load %arg7[%c0_6, %c0_7] : memref<16x128xf32, #tpu.memory_space<vmem>>, vector<16x128xf32>
    tpu.vector_store %arg7[%c0_6, %c0_7], %7 {strides = array<i32>} : memref<16x128xf32, #tpu.memory_space<vmem>>, vector<16x128xf32>,
    %c0_i32_8 = arith.constant 0 : i32
    %9 = arith.cmpi eq, %arg2, %c0_i32_8 : i32
    %10 = arith.extui %9 : i1 to i32
    %c0_i32_9 = arith.constant 0 : i32
    %11 = arith.cmpi ne, %10, %c0_i32_9 : i32
    scf.if %11 {
      %c0_10 = arith.constant 0 : index
      %c0_11 = arith.constant 0 : index
      %12 = vector.load %arg7[%c0_10, %c0_11] : memref<16x128xf32, #tpu.memory_space<vmem>>, vector<16x128xf32>
      %c0_12 = arith.constant 0 : index
      %c0_13 = arith.constant 0 : index
      %13 = vector.load %arg5[%c0_12, %c0_13] : memref<1x128xf32, #tpu.memory_space<vmem>>, vector<1x128xf32>
      %14 = vector.broadcast %13 : vector<1x128xf32> to vector<16x128xf32>
      %15 = arith.addf %12, %14 : vector<16x128xf32>
      %16 = arith.truncf %15 : vector<16x128xf32> to vector<16x128xbf16>
      %c0_14 = arith.constant 0 : index
      %c0_15 = arith.constant 0 : index
      %17 = vector.load %arg6[%c0_14, %c0_15] : memref<16x128xbf16, #tpu.memory_space<vmem>>, vector<16x128xbf16>
      tpu.vector_store %arg6[%c0_14, %c0_15], %16 {strides = array<i32>} : memref<16x128xbf16, #tpu.memory_space<vmem>>, vector<16x128xbf16>,
    } else {
    }
    return
  }
  func.func @transform_0(%arg0: i32, %arg1: i32, %arg2: i32) -> (i32, i32) {
    %c0_i32 = arith.constant 0 : i32
    return %arg0, %arg2 : i32, i32
  }
  func.func @transform_1(%arg0: i32, %arg1: i32, %arg2: i32) -> (i32, i32) {
    %c0_i32 = arith.constant 0 : i32
    return %arg2, %arg1 : i32, i32
  }
  func.func @transform_2(%arg0: i32, %arg1: i32, %arg2: i32) -> (i32, i32) {
    %c0_i32 = arith.constant 0 : i32
    %c0_i32_0 = arith.constant 0 : i32
    return %c0_i32, %arg1 : i32, i32
  }
  func.func @transform_3(%arg0: i32, %arg1: i32, %arg2: i32) -> (i32, i32) {
    %c0_i32 = arith.constant 0 : i32
    return %arg0, %arg1 : i32, i32
  }
}

</mosaic_0001>

<llo_original>
// kernel: tpu_custom_call.1
$region0: #{tpu_custom_call.1}
  #allocation0 [shape = 'u32[]', space=smem, size = 0x4, offset = 0x4, fixed_abs, tag = 'smem constant byte address 0x4 - core index']
  #allocation1 [shape = 'u32[144,128]{1,0:T(1,128)}', space=vmem, size = 0x12000, scoped, tag = 'internal scratch']
  #allocation2 [shape = 'f32[16,128]{1,0:T(8,128)}', space=vmem, size = 0x2000, scoped, tag = 'scratch operand']
  %s0 = inlined_call_operand.hbm [shape: bf16[16,128], index: 0, kind: input, shape index: {}]
  %s1 = inlined_call_operand.hbm [shape: bf16[128,384], index: 1, kind: input, shape index: {}]
  %s2 = inlined_call_operand.vmem [shape: f32[1,384], index: 2, kind: input, shape index: {}]
  %s3 = inlined_call_operand.hbm [shape: bf16[16,384], index: 3, kind: output, shape index: {}]
  %s4 = sld [smem:[#allocation0]]
  $region61: #{tpu_custom_call.1} parent=0
    _
  %s6 = ssub.s32 1, %s4
  %s7 = scalar_select 0, %s6, %s4
  $region1: #{tpu_custom_call.1} parent=0
    #allocation3 [shape = 'u8[4096]{0}', space=vmem, size = 0x1000, scoped, tag = 'input window, operand 0, single buffered']
    #allocation4 [shape = 's32[2]{0}', space=sflag, size = 0x8, scoped, tag = 'scoped memory for tpu_custom_call.1']
    #allocation5 [shape = 's32[2]{0}', space=sflag, size = 0x8, scoped, tag = 'scoped memory for tpu_custom_call.1']
    #allocation6 [shape = 'u8[65536]{0}', space=vmem, size = 0x10000, scoped, tag = 'input window, operand 1']
    #allocation7 [shape = 's32[2]{0}', space=sflag, size = 0x8, scoped, tag = 'scoped memory for tpu_custom_call.1']
    #allocation8 [shape = 'u8[8192]{0}', space=vmem, size = 0x2000, scoped, tag = 'output window, operand 0']
    %8 = vsyncpa [#allocation4], 0
    %9 = vsyncpa [#allocation7], 0
    %s10 = scalar_lea.sflag [#allocation7], 1
    %11 = vsyncpa %s10, 0
    %12 = vsyncpa [#allocation5], 0
    %s13 = scalar_lea.sflag [#allocation5], 1
    %14 = vsyncpa %s13, 0
    loop: start=0, step=1, limit=5
    $region2: #{tpu_custom_call.1} parent=1 // loop_pre_header
      _
    $region3: #{tpu_custom_call.1} parent=1 // loop_header
      %s16 = sphi 0, %s20
      %p17 = scmp.ge.s32.totalorder %s16, 5
      %s23 = sphi 0, %s42
      %s24 = sphi 0, %s38
      %s25 = sphi 0, %s34
      %s26 = sphi 0, %s23
      %s27 = sphi 0, %s24
      %s28 = sphi 0, %s25
      %s29 = sphi 0, %s26
      %s30 = sphi 0, %s27
      %s31 = sphi 0, %s28
      %s47 = sphi 0, %s49
      %s50 = sphi 0, %s47
      %s51 = sphi 0, %s50
      %s67 = sphi 0, %s51
      %s75 = sphi 0, %s77
      %s78 = sphi 0, %s75
      %s79 = sphi 0, %s78
      %s95 = sphi 0, %s79
      %s101 = sphi 0, %s103
      %s104 = sphi 0, %s101
      %s105 = sphi 0, %s104
      %s121 = sphi 0, %s105
      %s129 = sphi 0, %s131
      %s132 = sphi 0, %s129
      %s133 = sphi 0, %s132
      %s149 = sphi 0, %s133
    $region4: #{tpu_custom_call.1} parent=1 // loop_header_branch
      %19 = sbr.rel (%p17) target = $region8
    $region5: #{tpu_custom_call.1} parent=1 // loop_body
      %s21 = ssub.s32 %s16, 1
      %s22 = ssub.s32 %s16, 2
      %s32 = sadd.s32 1, %s25
      %p33 = scmp.ge.s32.totalorder %s32, 1
      %s34 = scalar_select %p33, 0, %s32
      %s35 = sadd.s32 1, %s24
      %s36 = scalar_select %p33, %s35, %s24
      %p37 = scmp.ge.s32.totalorder %s36, 3
      %s38 = scalar_select %p37, 0, %s36
      %s39 = sadd.s32 1, %s23
      %s40 = scalar_select %p37, %s39, %s23
      %p41 = scmp.ge.s32.totalorder %s40, 1
      %s42 = scalar_select %p41, 0, %s40
      %s43 = ssub.s32 %s23, %s42
      %s44 = ssub.s32 %s25, %s34
      %s45 = sor.u32 %s43, %s44
      %p46 = scmp.eq.s32.totalorder %s45, 0
      %s48 = sadd.s32 %s47, 1
      %s49 = scalar_select %p46, %s47, %s48
      %p52 = pneg %p46
      %p53 = scmp.eq.s32.totalorder %s16, 2
      %p54 = por %p52, %p53
      %p55 = scmp.ne.s32.totalorder %s47, %s50
      %p56 = scmp.eq.s32.totalorder %s16, 0
      %p57 = por %p55, %p56
      %p58 = scmp.ne.s32.totalorder %s47, %s50
      %p59 = scmp.eq.s32.totalorder %s21, 2
      %p60 = por %p58, %p59
      %p61 = scmp.ne.s32.totalorder %s50, %s51
      %p62 = scmp.eq.s32.totalorder %s21, 0
      %p63 = por %p61, %p62
      %p64 = scmp.ne.s32.totalorder %s50, %s51
      %p65 = scmp.eq.s32.totalorder %s22, 2
      %p66 = por %p64, %p65
      %p68 = scmp.ne.s32.totalorder %s51, %s67
      %p69 = scmp.eq.s32.totalorder %s22, 0
      %p70 = por %p68, %p69
      %s71 = ssub.s32 %s25, %s34
      %s72 = ssub.s32 %s24, %s38
      %s73 = sor.u32 %s71, %s72
      %p74 = scmp.eq.s32.totalorder %s73, 0
      %s76 = sadd.s32 %s75, 1
      %s77 = scalar_select %p74, %s75, %s76
      %p80 = pneg %p74
      %p81 = scmp.eq.s32.totalorder %s16, 2
      %p82 = por %p80, %p81
      %p83 = scmp.ne.s32.totalorder %s75, %s78
      %p84 = scmp.eq.s32.totalorder %s16, 0
      %p85 = por %p83, %p84
      %p86 = scmp.ne.s32.totalorder %s75, %s78
      %p87 = scmp.eq.s32.totalorder %s21, 2
      %p88 = por %p86, %p87
      %p89 = scmp.ne.s32.totalorder %s78, %s79
      %p90 = scmp.eq.s32.totalorder %s21, 0
      %p91 = por %p89, %p90
      %p92 = scmp.ne.s32.totalorder %s78, %s79
      %p93 = scmp.eq.s32.totalorder %s22, 2
      %p94 = por %p92, %p93
      %p96 = scmp.ne.s32.totalorder %s79, %s95
      %p97 = scmp.eq.s32.totalorder %s22, 0
      %p98 = por %p96, %p97
      %s99 = ssub.s32 %s24, %s38
      %p100 = scmp.eq.s32.totalorder %s99, 0
      %s102 = sadd.s32 %s101, 1
      %s103 = scalar_select %p100, %s101, %s102
      %p106 = pneg %p100
      %p107 = scmp.eq.s32.totalorder %s16, 2
      %p108 = por %p106, %p107
      %p109 = scmp.ne.s32.totalorder %s101, %s104
      %p110 = scmp.eq.s32.totalorder %s16, 0
      %p111 = por %p109, %p110
      %p112 = scmp.ne.s32.totalorder %s101, %s104
      %p113 = scmp.eq.s32.totalorder %s21, 2
      %p114 = por %p112, %p113
      %p115 = scmp.ne.s32.totalorder %s104, %s105
      %p116 = scmp.eq.s32.totalorder %s21, 0
      %p117 = por %p115, %p116
      %p118 = scmp.ne.s32.totalorder %s104, %s105
      %p119 = scmp.eq.s32.totalorder %s22, 2
      %p120 = por %p118, %p119
      %p122 = scmp.ne.s32.totalorder %s105, %s121
      %p123 = scmp.eq.s32.totalorder %s22, 0
      %p124 = por %p122, %p123
      %s125 = ssub.s32 %s23, %s42
      %s126 = ssub.s32 %s24, %s38
      %s127 = sor.u32 %s125, %s126
      %p128 = scmp.eq.s32.totalorder %s127, 0
      %s130 = sadd.s32 %s129, 1
      %s131 = scalar_select %p128, %s129, %s130
      %p134 = pneg %p128
      %p135 = scmp.eq.s32.totalorder %s16, 2
      %p136 = por %p134, %p135
      %p137 = scmp.ne.s32.totalorder %s129, %s132
      %p138 = scmp.eq.s32.totalorder %s16, 0
      %p139 = por %p137, %p138
      %p140 = scmp.ne.s32.totalorder %s129, %s132
      %p141 = scmp.eq.s32.totalorder %s21, 2
      %p142 = por %p140, %p141
      %p143 = scmp.ne.s32.totalorder %s132, %s133
      %p144 = scmp.eq.s32.totalorder %s21, 0
      %p145 = por %p143, %p144
      %p146 = scmp.ne.s32.totalorder %s132, %s133
      %p147 = scmp.eq.s32.totalorder %s22, 2
      %p148 = por %p146, %p147
      %p150 = scmp.ne.s32.totalorder %s133, %s149
      %p151 = scmp.eq.s32.totalorder %s22, 0
      %p152 = por %p150, %p151
      %p153 = scmp.le.s32.totalorder 1, %s16
      %p154 = scmp.lt.s32.totalorder %s16, 4
      %p155 = pnand %p153, %p154
      %p156 = pneg %p155
      // Predicated region
      $region9: #{tpu_custom_call.1} parent=5 // pred_check
        _
      $region10: #{tpu_custom_call.1} parent=5 // pred_check_branch
        %158 = sbr.rel (%p155) target = $region12
      $region11: #{tpu_custom_call.1} parent=5 // pred_region
        %s159 = ssub.s32 %s16, 1
        // Predicated region
        $region13: #{tpu_custom_call.1} parent=11 // pred_check
          %p160 = pneg %p63
        $region14: #{tpu_custom_call.1} parent=11 // pred_check_branch
          %162 = sbr.rel (%p160) target = $region16
        $region15: #{tpu_custom_call.1} parent=11 // pred_region
          %s163 = smul.u32 2, %s26
          %s165 = ssub.s32 128, 128
          %166 = vsyncadd [#allocation4], %s165
          %s167 = sadd.s32 %s28, %s163
          %s168 = smul.addr %s167, 64
          %s169 = scalar_lea.hbm %s0, %s168
          %s170 = sshll.u32 [#allocation3], 4
          %s171 = int_to_ptr.vmem [resolvable:$true] %s170
          %176 = dma.hbm_to_vmem [thread:$0]  %s169, 128, %s171, [#allocation4], 64, 64, 4
        $region16: #{tpu_custom_call.1} parent=11 // pred_fallthru
          _
      $region12: #{tpu_custom_call.1} parent=5 // pred_fallthru
        _
      %p177 = scmp.lt.s32.totalorder %s16, 3
      // Predicated region
      $region17: #{tpu_custom_call.1} parent=5 // pred_check
        %p178 = pneg %p177
      $region18: #{tpu_custom_call.1} parent=5 // pred_check_branch
        %180 = sbr.rel (%p178) target = $region20
      $region19: #{tpu_custom_call.1} parent=5 // pred_region
        // Predicated region
        $region21: #{tpu_custom_call.1} parent=19 // pred_check
          %p181 = pneg %p85
        $region22: #{tpu_custom_call.1} parent=19 // pred_check_branch
          %183 = sbr.rel (%p181) target = $region24
        $region23: #{tpu_custom_call.1} parent=19 // pred_region
          %s184 = sand.u32 %s75, 1
          %s185 = scalar_lea.sflag [#allocation7], %s184
          %s186 = sand.u32 %s75, 1
          %s187 = smul.addr %s186, 64
          %s188 = scalar_lea.vmem [#allocation6], %s187
          %s189 = smul.u32 16, %s25
          %s191 = ssub.s32 1024, 1024
          %192 = vsyncadd %s185, %s191
          %s193 = smul.addr %s189, 3
          %s194 = sadd.s32 %s24, %s193
          %s195 = smul.addr %s194, 64
          %s196 = scalar_lea.hbm %s1, %s195
          %s197 = sshll.u32 %s188, 4
          %s198 = int_to_ptr.vmem [resolvable:$true] %s197
          %203 = dma.hbm_to_vmem [thread:$0]  %s196, 1024, %s198, %s185, 192, 64, 4
        $region24: #{tpu_custom_call.1} parent=19 // pred_fallthru
          _
        // Predicated region
        $region25: #{tpu_custom_call.1} parent=19 // pred_check
          %p204 = pneg %p111
        $region26: #{tpu_custom_call.1} parent=19 // pred_check_branch
          %206 = sbr.rel (%p204) target = $region28
        $region27: #{tpu_custom_call.1} parent=19 // pred_region
          %p207 = scmp.lt.s32.totalorder %s24, 2
          %s208 = scalar_select %p207, %s24, 2
          %s209 = scalar_lea.vmem %s2, %s208
        $region28: #{tpu_custom_call.1} parent=19 // pred_fallthru
          _
      $region20: #{tpu_custom_call.1} parent=5 // pred_fallthru
        _
      %p210 = scmp.le.s32.totalorder 1, %s16
      %p211 = scmp.lt.s32.totalorder %s16, 4
      %p212 = pnand %p210, %p211
      %p213 = pneg %p212
      // Predicated region
      $region29: #{tpu_custom_call.1} parent=5 // pred_check
        _
      $region30: #{tpu_custom_call.1} parent=5 // pred_check_branch
        %215 = sbr.rel (%p212) target = $region32
      $region31: #{tpu_custom_call.1} parent=5 // pred_region
        %s216 = ssub.s32 %s16, 1
        // Predicated region
        $region33: #{tpu_custom_call.1} parent=31 // pred_check
          %p217 = pneg %p63
        $region34: #{tpu_custom_call.1} parent=31 // pred_check_branch
          %219 = sbr.rel (%p217) target = $region36
        $region35: #{tpu_custom_call.1} parent=31 // pred_region
          %220 = dma.done [#allocation4], 128
        $region36: #{tpu_custom_call.1} parent=31 // pred_fallthru
          _
        %s221 = sand.u32 %s78, 1
        %s222 = scalar_lea.sflag [#allocation7], %s221
        %s223 = sand.u32 %s78, 1
        %s224 = smul.addr %s223, 64
        %s225 = scalar_lea.vmem [#allocation6], %s224
        // Predicated region
        $region37: #{tpu_custom_call.1} parent=31 // pred_check
          %p226 = pneg %p91
        $region38: #{tpu_custom_call.1} parent=31 // pred_check_branch
          %228 = sbr.rel (%p226) target = $region40
        $region39: #{tpu_custom_call.1} parent=31 // pred_region
          %229 = dma.done %s222, 1024
        $region40: #{tpu_custom_call.1} parent=31 // pred_fallthru
          _
        %p230 = pneg %p63
        %p231 = pneg %p60
        %s232 = sand.u32 %s78, 1
        %s233 = scalar_lea.sflag [#allocation7], %s232
        %s234 = sand.u32 %s78, 1
        %s235 = smul.addr %s234, 64
        %s236 = scalar_lea.vmem [#allocation6], %s235
        %p237 = pneg %p91
        %p238 = pneg %p88
        %p239 = scmp.lt.s32.totalorder %s27, 2
        %s240 = scalar_select %p239, %s27, 2
        %s241 = scalar_lea.vmem %s2, %s240
        %p242 = pneg %p117
        %p243 = pneg %p114
        %p244 = pneg %p145
        %p245 = pneg %p142
        %s246 = sand.u32 %s132, 1
        %s247 = scalar_lea.sflag [#allocation5], %s246
        %s248 = sand.u32 %s132, 1
        %s249 = smul.addr %s248, 8
        %s250 = scalar_lea.vmem [#allocation8], %s249
        %s251 = smul.u32 2, %s26
        %s252 = smul.u32 16, %s28
        %p253 = scmp.lt.s32.totalorder %s27, 2
        %s254 = scalar_select %p253, %s27, 2
        %s255 = scalar_lea.vmem %s2, %s254
        %s256 = smul.u32 2, %s26
        %p258 = scmp.eq.s32.totalorder %s28, 0
        // Predicated region
        $region41: #{tpu_custom_call.1} parent=31 // pred_check
          %p259 = pneg %p258
        $region42: #{tpu_custom_call.1} parent=31 // pred_check_branch
          %261 = sbr.rel (%p259) target = $region44
        $region43: #{tpu_custom_call.1} parent=31 // pred_region
          %262 = vst [vmem:[#allocation2] sm:$0xff] 0.0
          %263 = vst [vmem:[#allocation2 + $0x8] sm:$0xff] 0.0
        $region44: #{tpu_custom_call.1} parent=31 // pred_fallthru
          _
        %v264 = vld [vmem:[#allocation2] sm:$0xff]
        %v265 = vld [vmem:[#allocation2 + $0x8] sm:$0xff]
        %v266 = vld [vmem:[#allocation3] sm:$0xf]
        %v267 = vld [vmem:[#allocation3 + $0x4] sm:$0xf]
        %v268 = vld [vmem:[%s225] sm:$0xf]
        %v269 = vld [vmem:[%s225 + $0x4] sm:$0xf]
        %v270 = vld [vmem:[%s225 + $0x8] sm:$0xf]
        %v271 = vld [vmem:[%s225 + $0xc] sm:$0xf]
        %v272 = vld [vmem:[%s225 + $0x10] sm:$0xf]
        %v273 = vld [vmem:[%s225 + $0x14] sm:$0xf]
        %v274 = vld [vmem:[%s225 + $0x18] sm:$0xf]
        %v275 = vld [vmem:[%s225 + $0x1c] sm:$0xf]
        %v276 = vld [vmem:[%s225 + $0x20] sm:$0xf]
        %v277 = vld [vmem:[%s225 + $0x24] sm:$0xf]
        %v278 = vld [vmem:[%s225 + $0x28] sm:$0xf]
        %v279 = vld [vmem:[%s225 + $0x2c] sm:$0xf]
        %v280 = vld [vmem:[%s225 + $0x30] sm:$0xf]
        %v281 = vld [vmem:[%s225 + $0x34] sm:$0xf]
        %v282 = vld [vmem:[%s225 + $0x38] sm:$0xf]
        %v283 = vld [vmem:[%s225 + $0x3c] sm:$0xf]
        %v286 = vunpack.c.l.b16 %v266
        %v287 = vunpack.c.l.b16 %v267
        %v288 = vpack.c.b16 %v287, %v286
        %v306 = vunpack.c.l.b16 %v268
        %v307 = vunpack.c.l.b16 %v269
        %v308 = vunpack.c.l.b16 %v270
        %v309 = vunpack.c.l.b16 %v271
        %v310 = vunpack.c.l.b16 %v272
        %v311 = vunpack.c.l.b16 %v273
        %v312 = vunpack.c.l.b16 %v274
        %v313 = vunpack.c.l.b16 %v275
        %v314 = vunpack.c.l.b16 %v276
        %v315 = vunpack.c.l.b16 %v277
        %v316 = vunpack.c.l.b16 %v278
        %v317 = vunpack.c.l.b16 %v279
        %v318 = vunpack.c.l.b16 %v280
        %v319 = vunpack.c.l.b16 %v281
        %v320 = vunpack.c.l.b16 %v282
        %v321 = vunpack.c.l.b16 %v283
        %v322 = vpack.c.b16 %v307, %v306
        %v323 = vpack.c.b16 %v309, %v308
        %v324 = vpack.c.b16 %v311, %v310
        %v325 = vpack.c.b16 %v313, %v312
        %v326 = vpack.c.b16 %v315, %v314
        %v327 = vpack.c.b16 %v317, %v316
        %v328 = vpack.c.b16 %v319, %v318
        %v329 = vpack.c.b16 %v321, %v320
        %338 = vmatprep.subr.bf16.mxu0 0
        %339 = vmatpush1.bf16.msra.mxu0 %v329
        %340 = vmatprep.subr.bf16.mxu0 0
        %341 = vmatpush1.bf16.msra.mxu0 %v328
        %342 = vmatprep.subr.bf16.mxu0 0
        %343 = vmatpush1.bf16.msra.mxu0 %v327
        %344 = vmatprep.subr.bf16.mxu0 0
        %345 = vmatpush1.bf16.msra.mxu0 %v326
        %346 = vmatprep.subr.bf16.mxu0 0
        %347 = vmatpush1.bf16.msra.mxu0 %v325
        %348 = vmatprep.subr.bf16.mxu0 0
        %349 = vmatpush1.bf16.msra.mxu0 %v324
        %350 = vmatprep.subr.bf16.mxu0 0
        %351 = vmatpush1.bf16.msra.mxu0 %v323
        %352 = vmatprep.subr.bf16.mxu0 0
        %353 = vmatpush1.bf16.msra.mxu0 %v322
        %354 = vmatprep.subr.bf16.mxu0 0
        %355 = vmatpush2.bf16.msra.mxu0 0
        %356 = vmatprep.subr.bf16.mxu0 0
        %357 = vmatpush2.bf16.msra.mxu0 0
        %358 = vmatprep.subr.bf16.mxu0 0
        %359 = vmatpush2.bf16.msra.mxu0 0
        %360 = vmatprep.subr.bf16.mxu0 0
        %361 = vmatpush2.bf16.msra.mxu0 0
        %362 = vmatprep.subr.bf16.mxu0 0
        %363 = vmatpush2.bf16.msra.mxu0 0
        %364 = vmatprep.subr.bf16.mxu0 0
        %365 = vmatpush2.bf16.msra.mxu0 0
        %366 = vmatprep.subr.bf16.mxu0 0
        %367 = vmatpush2.bf16.msra.mxu0 0
        %368 = vmatprep.subr.bf16.mxu0 0
        %369 = vmatpush2.bf16.msra.mxu0 0
        %370 = vmatprep.mubr.bf16.mxu0 0
        %371 = vmatmul.mubr.bf16.gmra.mxu0 %v288
        %v372 = vpop.f32.mrf.mxu0
        %v373 = vadd.f32 0.0, %v372
        %v374 = vpop.f32.mrf.mxu0
        %v375 = vpop.f32.mrf.mxu0
        %v376 = vadd.f32 0.0, %v375
        %v377 = vpop.f32.mrf.mxu0
        %378 = vdwg.mxu0
        %v379 = vadd.f32 %v264, %v373
        %v380 = vadd.f32 %v265, %v376
        %381 = vst [vmem:[#allocation2] sm:$0xff] %v379
        %382 = vst [vmem:[#allocation2 + $0x8] sm:$0xff] %v380
        // Predicated region
        $region45: #{tpu_custom_call.1} parent=31 // pred_check
          %p383 = pneg %p258
        $region46: #{tpu_custom_call.1} parent=31 // pred_check_branch
          %385 = sbr.rel (%p383) target = $region48
        $region47: #{tpu_custom_call.1} parent=31 // pred_region
          %v386 = vld [vmem:[#allocation2] sm:$0xff]
          %v387 = vld [vmem:[#allocation2 + $0x8] sm:$0xff]
          %v388 = vld [vmem:[%s255] sm:$0x1]
          %v390 = vlaneseq
          %v391 = vshrl.u32 %v390, 7
          %v392 = vsub.s32 0, %v391
          %v393 = vrot.slane %v388, %v392
          %v395 = vadd.f32 %v386, %v393
          %v396 = vadd.f32 %v387, %v393
          %v397 = vpack.c.bf16 %v396, %v395
          %v399 = vunpack.c.l.b16 %v397
          %v400 = vunpack.c.h.b16 %v397
          %v401 = vpack.c.b16 %v399, %v399
          %v402 = vpack.c.b16 %v400, %v400
          %405 = vst [vmem:[%s250] sm:$0xf] %v401
          %406 = vst [vmem:[%s250 + $0x4] sm:$0xf] %v402
        $region48: #{tpu_custom_call.1} parent=31 // pred_fallthru
          _
        %s407 = sand.u32 %s132, 1
        %s408 = scalar_lea.sflag [#allocation5], %s407
        %s409 = sand.u32 %s132, 1
        %s410 = smul.addr %s409, 8
        %s411 = scalar_lea.vmem [#allocation8], %s410
        // Predicated region
        $region49: #{tpu_custom_call.1} parent=31 // pred_check
          %p412 = pneg %p142
        $region50: #{tpu_custom_call.1} parent=31 // pred_check_branch
          %414 = sbr.rel (%p412) target = $region52
        $region51: #{tpu_custom_call.1} parent=31 // pred_region
          %s415 = smul.u32 2, %s26
          %s417 = ssub.s32 128, 128
          %418 = vsyncadd %s408, %s417
          %s419 = smul.addr %s415, 3
          %s420 = sadd.s32 %s27, %s419
          %s421 = smul.addr %s420, 64
          %s422 = scalar_lea.hbm %s3, %s421
          %s423 = sshll.u32 %s411, 4
          %s424 = int_to_ptr.vmem [resolvable:$true] %s423
          %429 = dma.vmem_to_hbm [thread:$0]  %s424, 128, %s422, %s408, 64, 192, 4
        $region52: #{tpu_custom_call.1} parent=31 // pred_fallthru
          _
      $region32: #{tpu_custom_call.1} parent=5 // pred_fallthru
        _
      %p430 = scmp.le.s32.totalorder 2, %s16
      // Predicated region
      $region53: #{tpu_custom_call.1} parent=5 // pred_check
        %p431 = pneg %p430
      $region54: #{tpu_custom_call.1} parent=5 // pred_check_branch
        %433 = sbr.rel (%p431) target = $region56
      $region55: #{tpu_custom_call.1} parent=5 // pred_region
        %s434 = ssub.s32 %s16, 2
        // Predicated region
        $region57: #{tpu_custom_call.1} parent=55 // pred_check
          %p435 = pneg %p148
        $region58: #{tpu_custom_call.1} parent=55 // pred_check_branch
          %437 = sbr.rel (%p435) target = $region60
        $region59: #{tpu_custom_call.1} parent=55 // pred_region
          %s438 = sand.u32 %s133, 1
          %s439 = scalar_lea.sflag [#allocation5], %s438
          %s440 = sand.u32 %s133, 1
          %s441 = smul.addr %s440, 8
          %s442 = scalar_lea.vmem [#allocation8], %s441
          %443 = dma.done %s439, 128
        $region60: #{tpu_custom_call.1} parent=55 // pred_fallthru
          _
      $region56: #{tpu_custom_call.1} parent=5 // pred_fallthru
        _
    $region6: #{tpu_custom_call.1} parent=1 // loop_footer
      %s20 = sadd.s32 1, %s16
    $region7: #{tpu_custom_call.1} parent=1 // loop_footer_branch
      %15 = sbr.rel target = $region3
    $region8: #{tpu_custom_call.1} parent=1 // loop_exit
      _
    %444 = vsyncpa [#allocation4], 1
    %s445 = scalar_lea.sflag [#allocation4], 1
    %446 = vsyncpa %s445, 1
    %447 = vsyncpa [#allocation7], 1
    %s448 = scalar_lea.sflag [#allocation7], 1
    %449 = vsyncpa %s448, 1
    %450 = vsyncpa [#allocation5], 1
    %s451 = scalar_lea.sflag [#allocation5], 1
    %452 = vsyncpa %s451, 1

</llo_original>
